<compile_context>
chip_gen: v5e
topology: v5e:2x2
jax: 0.10.0
libtpu: 0.0.40
codegen_flags: <defaults>
</compile_context>

<pallas_src>
import jax
import jax.numpy as jnp
from jax.experimental import pallas as pl
from jax.experimental.pallas import tpu as pltpu

IN_DIM = 6
HID = 128
OUT_DIM = 3
OUT_PAD = 8            # padded output width (== full array last dim -> legal block)
MAX_TILE_B = 1024      # per-step row cap for the large-batch path
SMALL_B = 512          # <= this: single grid step; above: >= 2 balanced tiles


def dqn_kernel(x_ref, w1_ref, b1_ref, w2_ref, b2_ref, w3_ref, b3_ref, q_ref):
    mm_dtype = w1_ref.dtype  # f32, or bf16 on v6e/v7x (f32 accumulate either way)
    x = x_ref[...].astype(mm_dtype)
    # Layer 1: Linear(6 -> 128) + ReLU   (K=6 underfills the MXU but is tiny)
    h1 = jnp.dot(x, w1_ref[...], preferred_element_type=jnp.float32)
    h1 = jnp.maximum(h1 + b1_ref[...], 0.0)
    # Layer 2: Linear(128 -> 128) + ReLU
    h2 = jnp.dot(h1.astype(mm_dtype), w2_ref[...], preferred_element_type=jnp.float32)
    h2 = jnp.maximum(h2 + b2_ref[...], 0.0)
    # Layer 3: Linear(128 -> 8-padded); cols >= 3 are zeros from padded W3/b3
    q = jnp.dot(h2.astype(mm_dtype), w3_ref[...], preferred_element_type=jnp.float32)
    q_ref[...] = (q + b3_ref[...]).astype(q_ref.dtype)


def _round_up(n, m):
    return ((n + m - 1) // m) * m


def _default_matmul_dtype():
    """bf16 matmuls pay off on v6e/v7x; keep f32 on v5e / unknown chips."""
    try:
        kind = jax.devices()[0].device_kind.lower()
    except Exception:
        return jnp.float32
    if "v6" in kind or "v7" in kind:
        return jnp.bfloat16
    return jnp.float32


def init_params(key, matmul_dtype=jnp.float32):
    """Init mimicking torch.nn.Linear default U(-1/sqrt(fan_in), 1/sqrt(fan_in)).

    W3/b3 are zero-padded to OUT_PAD columns HERE (once), and weights are
    pre-cast to the matmul dtype, so dqn_forward launches no extra XLA ops.
    Biases stay f32 (bias + ReLU run in f32 inside the kernel).
    """
    ks = jax.random.split(key, 6)

    def linear(kw, kb, fan_in, fan_out):
        bound = 1.0 / jnp.sqrt(fan_in)
        w = jax.random.uniform(kw, (fan_in, fan_out), jnp.float32, -bound, bound)
        b = jax.random.uniform(kb, (1, fan_out), jnp.float32, -bound, bound)
        return w, b

    w1, b1 = linear(ks[0], ks[1], IN_DIM, HID)
    w2, b2 = linear(ks[2], ks[3], HID, HID)
    w3, b3 = linear(ks[4], ks[5], HID, OUT_DIM)

    w3p = jnp.pad(w3, ((0, 0), (0, OUT_PAD - OUT_DIM)))
    b3p = jnp.pad(b3, ((0, 0), (0, OUT_PAD - OUT_DIM)))

    return {
        "w1": w1.astype(matmul_dtype), "b1": b1,
        "w2": w2.astype(matmul_dtype), "b2": b2,
        "w3p": w3p.astype(matmul_dtype), "b3p": b3p,
    }


def dqn_forward(x, params):
    """x: (B, 6) float32 -> (B, 3) float32 Q-values."""
    B = x.shape[0]

    # Tile selection:
    #   small batches  -> single grid step (tile covers the whole batch)
    #   large batches  -> balanced tiles, >= 2 grid steps (feeds both v7x TCs),
    #                     <= MAX_TILE_B rows/step, < 8 padding rows per tile.
    if B <= SMALL_B:
        tile_b = _round_up(max(B, 8), 8)
    else:
        n_tiles = max(2, pl.cdiv(B, MAX_TILE_B))
        tile_b = _round_up(pl.cdiv(B, n_tiles), 8)
    grid = (pl.cdiv(B, tile_b),)

    # NOTE: storing observations as (B, 8) upstream (zero last 2 cols, W1 as
    # (8, 128)) would give 32B-aligned input rows; kept (B, 6) here to avoid a
    # per-call pad op.
    q_pad = pl.pallas_call(
        dqn_kernel,
        out_shape=jax.ShapeDtypeStruct((B, OUT_PAD), jnp.float32),
        grid_spec=pltpu.PrefetchScalarGridSpec(
            num_scalar_prefetch=0,
            grid=grid,
            in_specs=[
                # batch tile of the input (partial last block handled by Pallas)
                pl.BlockSpec((tile_b, IN_DIM), lambda i: (i, 0)),
                # full weight / bias blocks (constant index_map -> VMEM-resident,
                # no per-step re-DMA; < 100 KiB total)
                pl.BlockSpec((IN_DIM, HID), lambda i: (0, 0)),
                pl.BlockSpec((1, HID), lambda i: (0, 0)),
                pl.BlockSpec((HID, HID), lambda i: (0, 0)),
                pl.BlockSpec((1, HID), lambda i: (0, 0)),
                pl.BlockSpec((HID, OUT_PAD), lambda i: (0, 0)),
                pl.BlockSpec((1, OUT_PAD), lambda i: (0, 0)),
            ],
            out_specs=pl.BlockSpec((tile_b, OUT_PAD), lambda i: (i, 0)),
        ),
        compiler_params=pltpu.CompilerParams(
            dimension_semantics=("parallel",),
            vmem_limit_bytes=32 * 1024 * 1024,
        ),
    )(x, params["w1"], params["b1"], params["w2"], params["b2"],
      params["w3p"], params["b3p"])

    # Strip the lane padding of the last layer (cheap XLA slice).
    return q_pad[:, :OUT_DIM]


def dqn_reference(x, p):
    """Pure-JAX reference using the (possibly bf16-rounded) stored weights."""
    w1 = p["w1"].astype(jnp.float32)
    w2 = p["w2"].astype(jnp.float32)
    w3 = p["w3p"].astype(jnp.float32)[:, :OUT_DIM]
    b3 = p["b3p"][:, :OUT_DIM]
    h1 = jnp.maximum(x @ w1 + p["b1"], 0.0)
    h2 = jnp.maximum(h1 @ w2 + p["b2"], 0.0)
    return h2 @ w3 + b3


if __name__ == "__main__":
    key = jax.random.PRNGKey(0)
    k_param, k_x1, k_x2, k_x3 = jax.random.split(key, 4)

    matmul_dtype = _default_matmul_dtype()
    params = init_params(k_param, matmul_dtype)
    tol = 1e-5 if matmul_dtype == jnp.float32 else 5e-2

    # Aligned small batch (single grid step).
    B1 = 16
    x1 = jax.random.normal(k_x1, (B1, IN_DIM), jnp.float32)
    q1 = jax.block_until_ready(dqn_forward(x1, params))
    assert q1.shape == (B1, OUT_DIM)
    assert jnp.allclose(q1, dqn_reference(x1, params), atol=tol, rtol=tol), \
        "mismatch vs reference (B=16)"

    # Ragged small batch (partial single block, no x padding).
    B2 = 5
    x2 = jax.random.normal(k_x2, (B2, IN_DIM), jnp.float32)
    q2 = jax.block_until_ready(dqn_forward(x2, params))
    assert q2.shape == (B2, OUT_DIM)
    assert jnp.allclose(q2, dqn_reference(x2, params), atol=tol, rtol=tol), \
        "mismatch vs reference (B=5)"

    # Ragged large batch (balanced multi-tile path, partial last block).
    B3 = 1037
    x3 = jax.random.normal(k_x3, (B3, IN_DIM), jnp.float32)
    q3 = jax.block_until_ready(dqn_forward(x3, params))
    assert q3.shape == (B3, OUT_DIM)
    assert jnp.allclose(q3, dqn_reference(x3, params), atol=tol, rtol=tol), \
        "mismatch vs reference (B=1037)"

    print("KERNEL_OK")
</pallas_src>

<mosaic_0001>
module attributes {stable_mosaic.version = 11 : i64} {
  func.func @dqn_kernel(%arg0: i32, %arg1: memref<16x6xf32, #tpu.memory_space<vmem>>, %arg2: memref<6x128xf32, #tpu.memory_space<vmem>>, %arg3: memref<1x128xf32, #tpu.memory_space<vmem>>, %arg4: memref<128x128xf32, #tpu.memory_space<vmem>>, %arg5: memref<1x128xf32, #tpu.memory_space<vmem>>, %arg6: memref<128x8xf32, #tpu.memory_space<vmem>>, %arg7: memref<1x8xf32, #tpu.memory_space<vmem>>, %arg8: memref<16x8xf32, #tpu.memory_space<vmem>>) attributes {dimension_semantics = [#tpu.dimension_semantics<parallel>], iteration_bounds = array<i64: 1>, scalar_prefetch = 0 : i64, scratch_operands = 0 : i64, tpu.core_type = #tpu.core_type<tc>, window_params = [{transform_indices = @transform_0, window_bounds = array<i64: 16, 6>}, {pipeline_mode = #tpu.pipeline_mode<synchronous>, transform_indices = @transform_1, window_bounds = array<i64: 6, 128>}, {pipeline_mode = #tpu.pipeline_mode<synchronous>, transform_indices = @transform_2, window_bounds = array<i64: 1, 128>}, {pipeline_mode = #tpu.pipeline_mode<synchronous>, transform_indices = @transform_3, window_bounds = array<i64: 128, 128>}, {pipeline_mode = #tpu.pipeline_mode<synchronous>, transform_indices = @transform_4, window_bounds = array<i64: 1, 128>}, {pipeline_mode = #tpu.pipeline_mode<synchronous>, transform_indices = @transform_5, window_bounds = array<i64: 128, 8>}, {pipeline_mode = #tpu.pipeline_mode<synchronous>, transform_indices = @transform_6, window_bounds = array<i64: 1, 8>}, {transform_indices = @transform_7, window_bounds = array<i64: 16, 8>}]} {
    %c0 = arith.constant 0 : index
    %c0_0 = arith.constant 0 : index
    %0 = vector.load %arg1[%c0, %c0_0] : memref<16x6xf32, #tpu.memory_space<vmem>>, vector<16x6xf32>
    %c0_1 = arith.constant 0 : index
    %c0_2 = arith.constant 0 : index
    %1 = vector.load %arg2[%c0_1, %c0_2] : memref<6x128xf32, #tpu.memory_space<vmem>>, vector<6x128xf32>
    %cst = arith.constant dense<0.000000e+00> : vector<16x128xf32>
    %2 = tpu.matmul %0, %1, %cst {dimension_numbers = #tpu.dot_dimension_numbers<[1], [0], [0], [1], [0, 0, 1, 1], [], []>} : vector<16x6xf32>, vector<6x128xf32>, vector<16x128xf32> -> vector<16x128xf32>
    %c0_3 = arith.constant 0 : index
    %c0_4 = arith.constant 0 : index
    %3 = vector.load %arg3[%c0_3, %c0_4] : memref<1x128xf32, #tpu.memory_space<vmem>>, vector<1x128xf32>
    %4 = vector.broadcast %3 : vector<1x128xf32> to vector<16x128xf32>
    %5 = arith.addf %2, %4 : vector<16x128xf32>
    %cst_5 = arith.constant 0.000000e+00 : f32
    %6 = vector.broadcast %cst_5 : f32 to vector<16x128xf32>
    %7 = arith.maximumf %5, %6 : vector<16x128xf32>
    %c0_6 = arith.constant 0 : index
    %c0_7 = arith.constant 0 : index
    %8 = vector.load %arg4[%c0_6, %c0_7] : memref<128x128xf32, #tpu.memory_space<vmem>>, vector<128x128xf32>
    %cst_8 = arith.constant dense<0.000000e+00> : vector<16x128xf32>
    %9 = tpu.matmul %7, %8, %cst_8 {dimension_numbers = #tpu.dot_dimension_numbers<[1], [0], [0], [1], [0, 0, 1, 1], [], []>} : vector<16x128xf32>, vector<128x128xf32>, vector<16x128xf32> -> vector<16x128xf32>
    %c0_9 = arith.constant 0 : index
    %c0_10 = arith.constant 0 : index
    %10 = vector.load %arg5[%c0_9, %c0_10] : memref<1x128xf32, #tpu.memory_space<vmem>>, vector<1x128xf32>
    %11 = vector.broadcast %10 : vector<1x128xf32> to vector<16x128xf32>
    %12 = arith.addf %9, %11 : vector<16x128xf32>
    %cst_11 = arith.constant 0.000000e+00 : f32
    %13 = vector.broadcast %cst_11 : f32 to vector<16x128xf32>
    %14 = arith.maximumf %12, %13 : vector<16x128xf32>
    %c0_12 = arith.constant 0 : index
    %c0_13 = arith.constant 0 : index
    %15 = vector.load %arg6[%c0_12, %c0_13] : memref<128x8xf32, #tpu.memory_space<vmem>>, vector<128x8xf32>
    %cst_14 = arith.constant dense<0.000000e+00> : vector<16x8xf32>
    %16 = tpu.matmul %14, %15, %cst_14 {dimension_numbers = #tpu.dot_dimension_numbers<[1], [0], [0], [1], [0, 0, 1, 1], [], []>} : vector<16x128xf32>, vector<128x8xf32>, vector<16x8xf32> -> vector<16x8xf32>
    %c0_15 = arith.constant 0 : index
    %c0_16 = arith.constant 0 : index
    %17 = vector.load %arg7[%c0_15, %c0_16] : memref<1x8xf32, #tpu.memory_space<vmem>>, vector<1x8xf32>
    %18 = vector.broadcast %17 : vector<1x8xf32> to vector<16x8xf32>
    %19 = arith.addf %16, %18 : vector<16x8xf32>
    %c0_17 = arith.constant 0 : index
    %c0_18 = arith.constant 0 : index
    %20 = vector.load %arg8[%c0_17, %c0_18] : memref<16x8xf32, #tpu.memory_space<vmem>>, vector<16x8xf32>
    tpu.vector_store %arg8[%c0_17, %c0_18], %19 {strides = array<i32>} : memref<16x8xf32, #tpu.memory_space<vmem>>, vector<16x8xf32>,
    return
  }
  func.func @transform_0(%arg0: i32) -> (i32, i32) {
    %c0_i32 = arith.constant 0 : i32
    %c0_i32_0 = arith.constant 0 : i32
    return %arg0, %c0_i32 : i32, i32
  }
  func.func @transform_1(%arg0: i32) -> (i32, i32) {
    %c0_i32 = arith.constant 0 : i32
    %c0_i32_0 = arith.constant 0 : i32
    %c0_i32_1 = arith.constant 0 : i32
    return %c0_i32, %c0_i32_0 : i32, i32
  }
  func.func @transform_2(%arg0: i32) -> (i32, i32) {
    %c0_i32 = arith.constant 0 : i32
    %c0_i32_0 = arith.constant 0 : i32
    %c0_i32_1 = arith.constant 0 : i32
    return %c0_i32, %c0_i32_0 : i32, i32
  }
  func.func @transform_3(%arg0: i32) -> (i32, i32) {
    %c0_i32 = arith.constant 0 : i32
    %c0_i32_0 = arith.constant 0 : i32
    %c0_i32_1 = arith.constant 0 : i32
    return %c0_i32, %c0_i32_0 : i32, i32
  }
  func.func @transform_4(%arg0: i32) -> (i32, i32) {
    %c0_i32 = arith.constant 0 : i32
    %c0_i32_0 = arith.constant 0 : i32
    %c0_i32_1 = arith.constant 0 : i32
    return %c0_i32, %c0_i32_0 : i32, i32
  }
  func.func @transform_5(%arg0: i32) -> (i32, i32) {
    %c0_i32 = arith.constant 0 : i32
    %c0_i32_0 = arith.constant 0 : i32
    %c0_i32_1 = arith.constant 0 : i32
    return %c0_i32, %c0_i32_0 : i32, i32
  }
  func.func @transform_6(%arg0: i32) -> (i32, i32) {
    %c0_i32 = arith.constant 0 : i32
    %c0_i32_0 = arith.constant 0 : i32
    %c0_i32_1 = arith.constant 0 : i32
    return %c0_i32, %c0_i32_0 : i32, i32
  }
  func.func @transform_7(%arg0: i32) -> (i32, i32) {
    %c0_i32 = arith.constant 0 : i32
    %c0_i32_0 = arith.constant 0 : i32
    return %arg0, %c0_i32 : i32, i32
  }
}

</mosaic_0001>

<llo_original>
// kernel: tpu_custom_call.1
$region0: #{tpu_custom_call.1}
  #allocation0 [shape = 'u32[]', space=smem, size = 0x4, offset = 0x4, fixed_abs, tag = 'smem constant byte address 0x4 - core index']
  #allocation1 [shape = 'u32[72,128]{1,0:T(1,128)}', space=vmem, size = 0x9000, scoped, tag = 'internal scratch']
  %s0 = inlined_call_operand.vmem [shape: f32[16,6], index: 0, kind: input, shape index: {}]
  %s1 = inlined_call_operand.vmem [shape: f32[6,128], index: 1, kind: input, shape index: {}]
  %s2 = inlined_call_operand.vmem [shape: f32[1,128], index: 2, kind: input, shape index: {}]
  %s3 = inlined_call_operand.vmem [shape: f32[128,128], index: 3, kind: input, shape index: {}]
  %s4 = inlined_call_operand.vmem [shape: f32[1,128], index: 4, kind: input, shape index: {}]
  %s5 = inlined_call_operand.vmem [shape: f32[128,8], index: 5, kind: input, shape index: {}]
  %s6 = inlined_call_operand.vmem [shape: f32[1,8], index: 6, kind: input, shape index: {}]
  %s7 = inlined_call_operand.vmem [shape: f32[16,8], index: 7, kind: output, shape index: {}]
  %s8 = sld [smem:[#allocation0]]
  $region38: #{tpu_custom_call.1} parent=0
    _
  %s10 = ssub.s32 1, %s8
  %s11 = scalar_select 0, %s10, %s8
  // Predicated region
  $region2: #{tpu_custom_call.1} parent=0 // pred_check
    _
  $region3: #{tpu_custom_call.1} parent=0 // pred_check_branch
    %13 = sbr.rel (0) target = $region5
  $region4: #{tpu_custom_call.1} parent=0 // pred_region
    _
  $region5: #{tpu_custom_call.1} parent=0 // pred_fallthru
    _
  // Predicated region
  $region6: #{tpu_custom_call.1} parent=0 // pred_check
    _
  $region7: #{tpu_custom_call.1} parent=0 // pred_check_branch
    %15 = sbr.rel (0) target = $region9
  $region8: #{tpu_custom_call.1} parent=0 // pred_region
    _
  $region9: #{tpu_custom_call.1} parent=0 // pred_fallthru
    _
  // Predicated region
  $region10: #{tpu_custom_call.1} parent=0 // pred_check
    _
  $region11: #{tpu_custom_call.1} parent=0 // pred_check_branch
    %17 = sbr.rel (0) target = $region13
  $region12: #{tpu_custom_call.1} parent=0 // pred_region
    _
  $region13: #{tpu_custom_call.1} parent=0 // pred_fallthru
    _
  // Predicated region
  $region14: #{tpu_custom_call.1} parent=0 // pred_check
    _
  $region15: #{tpu_custom_call.1} parent=0 // pred_check_branch
    %19 = sbr.rel (0) target = $region17
  $region16: #{tpu_custom_call.1} parent=0 // pred_region
    _
  $region17: #{tpu_custom_call.1} parent=0 // pred_fallthru
    _
  // Predicated region
  $region18: #{tpu_custom_call.1} parent=0 // pred_check
    _
  $region19: #{tpu_custom_call.1} parent=0 // pred_check_branch
    %21 = sbr.rel (0) target = $region21
  $region20: #{tpu_custom_call.1} parent=0 // pred_region
    _
  $region21: #{tpu_custom_call.1} parent=0 // pred_fallthru
    _
  // Predicated region
  $region22: #{tpu_custom_call.1} parent=0 // pred_check
    _
  $region23: #{tpu_custom_call.1} parent=0 // pred_check_branch
    %23 = sbr.rel (0) target = $region25
  $region24: #{tpu_custom_call.1} parent=0 // pred_region
    _
  $region25: #{tpu_custom_call.1} parent=0 // pred_fallthru
    _
  // Predicated region
  $region26: #{tpu_custom_call.1} parent=0 // pred_check
    _
  $region27: #{tpu_custom_call.1} parent=0 // pred_check_branch
    %25 = sbr.rel (0) target = $region29
  $region28: #{tpu_custom_call.1} parent=0 // pred_region
    _
  $region29: #{tpu_custom_call.1} parent=0 // pred_fallthru
    _
  %v26 = vld [vmem:[%s0] sm:$0xff]
  %v27 = vld [vmem:[%s0 + $0x8] sm:$0xff]
  %v28 = vld [vmem:[%s1] sm:$0x3f]
  %v29 = vld [vmem:[%s2] sm:$0x1]
  %v31 = vperm.slane %v29, 0
  %vm33 = vcmask 48128
  %v35 = vsel %vm33, %v26, 0
  %v38 = vsel %vm33, %v27, 0
  %vm40 = vcmask 1045504
  %v42 = vsel %vm40, %v28, 0
  %44 = vmatpush.msra.mxu0 0.0
  %45 = vmatpush.msra.mxu0 0.0
  %46 = vmatpush.msra.mxu0 0.0
  %47 = vmatpush.msra.mxu0 0.0
  %48 = vmatpush.msra.mxu0 0.0
  %49 = vmatpush.msra.mxu0 0.0
  %50 = vmatpush.msra.mxu0 0.0
  %51 = vmatpush.msra.mxu0 0.0
  %52 = vmatpush.msra.mxu0 0.0
  %53 = vmatpush.msra.mxu0 0.0
  %54 = vmatpush.msra.mxu0 0.0
  %55 = vmatpush.msra.mxu0 0.0
  %56 = vmatpush.msra.mxu0 0.0
  %57 = vmatpush.msra.mxu0 0.0
  %58 = vmatpush.msra.mxu0 0.0
  %59 = vmatpush.msra.mxu0 %v42
  %60 = vmatmul.f32.gmra.mxu0 %v35
  %v61 = vpop.f32.mrf.mxu0
  %v62 = vadd.f32 %v31, %v61
  %63 = vmatmul.f32.gmra.mxu0 %v38
  %v64 = vpop.f32.mrf.mxu0
  %v65 = vadd.f32 %v31, %v64
  %66 = vdwg.mxu0
  %v67 = vmax.f32 %v62, 0.0
  %v68 = vmax.f32 %v65, 0.0
  %v69 = vld [vmem:[%s3] sm:$0xff]
  %v70 = vld [vmem:[%s3 + $0x8] sm:$0xff]
  %v71 = vld [vmem:[%s3 + $0x10] sm:$0xff]
  %v72 = vld [vmem:[%s3 + $0x18] sm:$0xff]
  %v73 = vld [vmem:[%s3 + $0x20] sm:$0xff]
  %v74 = vld [vmem:[%s3 + $0x28] sm:$0xff]
  %v75 = vld [vmem:[%s3 + $0x30] sm:$0xff]
  %v76 = vld [vmem:[%s3 + $0x38] sm:$0xff]
  %v77 = vld [vmem:[%s3 + $0x40] sm:$0xff]
  %v78 = vld [vmem:[%s3 + $0x48] sm:$0xff]
  %v79 = vld [vmem:[%s3 + $0x50] sm:$0xff]
  %v80 = vld [vmem:[%s3 + $0x58] sm:$0xff]
  %v81 = vld [vmem:[%s3 + $0x60] sm:$0xff]
  %v82 = vld [vmem:[%s3 + $0x68] sm:$0xff]
  %v83 = vld [vmem:[%s3 + $0x70] sm:$0xff]
  %v84 = vld [vmem:[%s3 + $0x78] sm:$0xff]
  %v85 = vld [vmem:[%s4] sm:$0x1]
  %v87 = vperm.slane %v85, 0
  %89 = vmatpush.msra.mxu0 %v84
  %90 = vmatpush.msra.mxu0 %v83
  %91 = vmatpush.msra.mxu0 %v82
  %92 = vmatpush.msra.mxu0 %v81
  %93 = vmatpush.msra.mxu0 %v80
  %94 = vmatpush.msra.mxu0 %v79
  %95 = vmatpush.msra.mxu0 %v78
  %96 = vmatpush.msra.mxu0 %v77
  %97 = vmatpush.msra.mxu0 %v76
  %98 = vmatpush.msra.mxu0 %v75
  %99 = vmatpush.msra.mxu0 %v74
  %100 = vmatpush.msra.mxu0 %v73
  %101 = vmatpush.msra.mxu0 %v72
  %102 = vmatpush.msra.mxu0 %v71
  %103 = vmatpush.msra.mxu0 %v70
  %104 = vmatpush.msra.mxu0 %v69
  %105 = vmatmul.f32.gmra.mxu0 %v67
  %v106 = vpop.f32.mrf.mxu0
  %v107 = vadd.f32 %v87, %v106
  %108 = vmatmul.f32.gmra.mxu0 %v68
  %v109 = vpop.f32.mrf.mxu0
  %v110 = vadd.f32 %v87, %v109
  %111 = vdwg.mxu0
  %v112 = vmax.f32 %v107, 0.0
  %v113 = vmax.f32 %v110, 0.0
  %v114 = vld [vmem:[%s5] sm:$0xff]
  %v115 = vld [vmem:[%s5 + $0x8] sm:$0xff]
  %v116 = vld [vmem:[%s5 + $0x10] sm:$0xff]
  %v117 = vld [vmem:[%s5 + $0x18] sm:$0xff]
  %v118 = vld [vmem:[%s5 + $0x20] sm:$0xff]
  %v119 = vld [vmem:[%s5 + $0x28] sm:$0xff]
  %v120 = vld [vmem:[%s5 + $0x30] sm:$0xff]
  %v121 = vld [vmem:[%s5 + $0x38] sm:$0xff]
  %v122 = vld [vmem:[%s5 + $0x40] sm:$0xff]
  %v123 = vld [vmem:[%s5 + $0x48] sm:$0xff]
  %v124 = vld [vmem:[%s5 + $0x50] sm:$0xff]
  %v125 = vld [vmem:[%s5 + $0x58] sm:$0xff]
  %v126 = vld [vmem:[%s5 + $0x60] sm:$0xff]
  %v127 = vld [vmem:[%s5 + $0x68] sm:$0xff]
  %v128 = vld [vmem:[%s5 + $0x70] sm:$0xff]
  %v129 = vld [vmem:[%s5 + $0x78] sm:$0xff]
  %v130 = vld [vmem:[%s6] sm:$0x1]
  %v132 = vperm.slane %v130, 0
  %134 = vmatpush.msra.mxu0 %v129
  %135 = vmatpush.msra.mxu0 %v128
  %136 = vmatpush.msra.mxu0 %v127
  %137 = vmatpush.msra.mxu0 %v126
  %138 = vmatpush.msra.mxu0 %v125
  %139 = vmatpush.msra.mxu0 %v124
  %140 = vmatpush.msra.mxu0 %v123
  %141 = vmatpush.msra.mxu0 %v122
  %142 = vmatpush.msra.mxu0 %v121
  %143 = vmatpush.msra.mxu0 %v120
  %144 = vmatpush.msra.mxu0 %v119
  %145 = vmatpush.msra.mxu0 %v118
  %146 = vmatpush.msra.mxu0 %v117
  %147 = vmatpush.msra.mxu0 %v116
  %148 = vmatpush.msra.mxu0 %v115
  %149 = vmatpush.msra.mxu0 %v114
  %150 = vmatmul.f32.gmra.mxu0 %v112
  %v151 = vpop.f32.mrf.mxu0
  %v152 = vadd.f32 %v132, %v151
  %153 = vmatmul.f32.gmra.mxu0 %v113
  %v154 = vpop.f32.mrf.mxu0
  %v155 = vadd.f32 %v132, %v154
  %156 = vdwg.mxu0
  %vm157 = vcmask 64512
  %158 = vst.msk [vmem:[%s7] sm:$0xff] %vm157, %v152
  %159 = vst.msk [vmem:[%s7 + $0x8] sm:$0xff] %vm157, %v155
  // Predicated region
  $region30: #{tpu_custom_call.1} parent=0 // pred_check
    _
  $region31: #{tpu_custom_call.1} parent=0 // pred_check_branch
    %161 = sbr.rel (0) target = $region33
  $region32: #{tpu_custom_call.1} parent=0 // pred_region
    _
  $region33: #{tpu_custom_call.1} parent=0 // pred_fallthru
    _
  // Predicated region
  $region34: #{tpu_custom_call.1} parent=0 // pred_check
    _
  $region35: #{tpu_custom_call.1} parent=0 // pred_check_branch
    %163 = sbr.rel (0) target = $region37
  $region36: #{tpu_custom_call.1} parent=0 // pred_region
    _
  $region37: #{tpu_custom_call.1} parent=0 // pred_fallthru
    _

</llo_original>
